<compile_context>
chip_gen: v7x
topology: tpu7x:2x2x1
jax: 0.10.0
libtpu: 0.0.40
codegen_flags: <defaults>
</compile_context>

<pallas_src>
import functools

import jax
import jax.numpy as jnp
import numpy as np
from jax.experimental import pallas as pl
from jax.experimental.pallas import tpu as pltpu

# ---------------- configuration (small shapes consistent with the module) ---
BATCH = 8            # rows of the pooled hidden state (batch dimension)
INPUT_DIM = 32       # classifier input features
NUM_CLASSES = 128    # classes per head (real LeViT: 1000 -> padded to 1024)
NUM_HEADS = 2        # classifier + distillation classifier
BN_EPS = 1e-5

LANE = 128           # vreg lane width  -> output-dim padding granule
SUBLANE = 8          # vreg sublane cnt -> row padding granule


def _round_up(x, m):
    return (x + m - 1) // m * m


# ---------------- fused Pallas kernel ---------------------------------------
def levit_heads_kernel(x_ref, w_ref, b_ref, out_ref):
    # x_ref:   (M_pad, K)      bf16  pooled hidden state (rows padded to 8)
    # w_ref:   (K, N_pad)      bf16  BN-folded weights of ALL heads, concat'd
    # b_ref:   (1, N_pad)      f32   BN-folded biases of ALL heads
    # out_ref: (M_pad, N_pad)  f32   logits, lane-dense (full (8,128) tiles)
    acc = jnp.dot(x_ref[...], w_ref[...], preferred_element_type=jnp.float32)
    out_ref[...] = (acc + b_ref[...]).astype(out_ref.dtype)


@functools.partial(jax.jit, static_argnames=("n_valid",))
def levit_heads_forward(x, w_pad, b_pad, n_valid):
    """Per-forward hot path: cast/pad x, one pallas_call, slice valid logits.

    x:      (M, K) f32   pooled hidden state
    w_pad:  (K, N_pad) bf16   pre-folded, pre-padded (from pack_heads)
    b_pad:  (1, N_pad) f32    pre-folded, pre-padded
    returns (M, n_valid) f32  concatenated logits of all fused heads
    """
    m, k = x.shape
    n_pad = w_pad.shape[1]
    m_pad = _round_up(max(m, SUBLANE), SUBLANE)

    x_p = (
        jnp.zeros((m_pad, k), jnp.bfloat16)
        .at[:m, :]
        .set(x.astype(jnp.bfloat16))
    )

    flops = 2 * m_pad * k * n_pad
    bytes_accessed = (
        m_pad * k * 2            # x  (bf16)
        + k * n_pad * 2          # W  (bf16)
        + n_pad * 4              # b  (f32)
        + m_pad * n_pad * 4      # out (f32)
    )

    out = pl.pallas_call(
        levit_heads_kernel,
        out_shape=jax.ShapeDtypeStruct((m_pad, n_pad), jnp.float32),
        in_specs=[
            pl.BlockSpec(memory_space=pltpu.MemorySpace.VMEM),
            pl.BlockSpec(memory_space=pltpu.MemorySpace.VMEM),
            pl.BlockSpec(memory_space=pltpu.MemorySpace.VMEM),
        ],
        out_specs=pl.BlockSpec(memory_space=pltpu.MemorySpace.VMEM),
        cost_estimate=pl.CostEstimate(
            flops=flops, transcendentals=0, bytes_accessed=bytes_accessed
        ),
    )(x_p, w_pad, b_pad)

    return out[:m, :n_valid]


# ---------------- weight-load-time parameter packing ------------------------
def fold_bn_into_linear(gamma, beta, r_mean, r_var, w, b):
    """Fold eval-mode BatchNorm1d (applied BEFORE the Linear) into the Linear.

    w: torch Linear weight layout (out_dim, in_dim); b: (out_dim,).
    Returns W_eff (in_dim, out_dim), b_eff (out_dim,) with
    x @ W_eff + b_eff == Linear(BatchNorm1d_eval(x)).
    """
    s = gamma / jnp.sqrt(r_var + BN_EPS)         # (in_dim,)
    w_eff = w.T * s[:, None]                     # (in_dim, out_dim)
    b_eff = b + (beta - r_mean * s) @ w.T        # (out_dim,)
    return w_eff, b_eff


def pack_heads(head_params):
    """Fold + concatenate every head's parameters, pad lane-dense, cast bf16.

    head_params: list of (gamma, beta, r_mean, r_var, w, b) per head.
    Returns (w_pad bf16 (K, N_pad), b_pad f32 (1, N_pad), n_valid).
    Run ONCE at weight-load time — not in the per-forward path.
    """
    ws, bs = [], []
    for p in head_params:
        w_eff, b_eff = fold_bn_into_linear(*p)
        ws.append(w_eff)
        bs.append(b_eff)
    w_cat = jnp.concatenate(ws, axis=1)          # (K, N)
    b_cat = jnp.concatenate(bs, axis=0)          # (N,)
    k, n = w_cat.shape
    n_pad = _round_up(max(n, LANE), LANE)
    w_pad = (
        jnp.zeros((k, n_pad), jnp.bfloat16)
        .at[:, :n]
        .set(w_cat.astype(jnp.bfloat16))
    )
    b_pad = (
        jnp.zeros((1, n_pad), jnp.float32)
        .at[:, :n]
        .set(b_cat.reshape(1, -1).astype(jnp.float32))
    )
    return w_pad, b_pad, n


# ---------------- pure-JAX reference (unfolded module semantics) ------------
def reference_forward(x, gamma, beta, r_mean, r_var, w, b):
    x_norm = (x - r_mean) / jnp.sqrt(r_var + BN_EPS) * gamma + beta
    return x_norm @ w.T + b


# ---------------- main -------------------------------------------------------
if __name__ == "__main__":
    root = jax.random.PRNGKey(0)
    k_x, k_heads = jax.random.split(root, 2)

    # hidden_state: (batch, input_dim) — the pooled sequence LeViT feeds to
    # its classification head(s).
    x = jax.random.normal(k_x, (BATCH, INPUT_DIM), jnp.float32)

    # Two LevitClassificationLayer instances (classifier + distill classifier)
    head_params = []
    head_keys = jax.random.split(k_heads, NUM_HEADS)
    for hk in head_keys:
        k_w, k_b, k_g, k_bt, k_m, k_v = jax.random.split(hk, 6)
        w = jax.random.normal(k_w, (NUM_CLASSES, INPUT_DIM), jnp.float32) * 0.05
        b = 0.1 * jax.random.normal(k_b, (NUM_CLASSES,), jnp.float32)
        gamma = 1.0 + 0.1 * jax.random.normal(k_g, (INPUT_DIM,), jnp.float32)
        beta = 0.1 * jax.random.normal(k_bt, (INPUT_DIM,), jnp.float32)
        r_mean = 0.1 * jax.random.normal(k_m, (INPUT_DIM,), jnp.float32)
        r_var = 0.5 + jax.random.uniform(k_v, (INPUT_DIM,), jnp.float32)
        head_params.append((gamma, beta, r_mean, r_var, w, b))

    # Weight-load time: fold BN into each Linear, concat heads, pad, cast bf16.
    w_pad, b_pad, n_valid = pack_heads(head_params)
    w_pad, b_pad = jax.block_until_ready((w_pad, b_pad))

    # Hot path: one kernel call -> logits for BOTH heads.
    logits_all = levit_heads_forward(x, w_pad, b_pad, n_valid)
    logits_all = jax.block_until_ready(logits_all)

    # Verify each head against the unfolded f32 module semantics.
    # (bf16 MXU inputs -> loosened tolerance; accumulation stays f32.)
    for h, p in enumerate(head_params):
        ref = reference_forward(x, *p)
        got = logits_all[:, h * NUM_CLASSES:(h + 1) * NUM_CLASSES]
        np.testing.assert_allclose(
            np.asarray(got), np.asarray(ref), rtol=2e-2, atol=2e-2
        )

    print("KERNEL_OK")
</pallas_src>

<mosaic_0001>
module attributes {stable_mosaic.version = 11 : i64} {
  func.func @levit_heads_kernel(%arg0: memref<8x32xbf16, #tpu.memory_space<vmem>>, %arg1: memref<32x256xbf16, #tpu.memory_space<vmem>>, %arg2: memref<1x256xf32, #tpu.memory_space<vmem>>, %arg3: memref<8x256xf32, #tpu.memory_space<vmem>>) attributes {dimension_semantics = [], scalar_prefetch = 0 : i64, scratch_operands = 0 : i64, tpu.core_type = #tpu.core_type<tc>} {
    %c0 = arith.constant 0 : index
    %c0_0 = arith.constant 0 : index
    %0 = vector.load %arg0[%c0, %c0_0] : memref<8x32xbf16, #tpu.memory_space<vmem>>, vector<8x32xbf16>
    %c0_1 = arith.constant 0 : index
    %c0_2 = arith.constant 0 : index
    %1 = vector.load %arg1[%c0_1, %c0_2] : memref<32x256xbf16, #tpu.memory_space<vmem>>, vector<32x256xbf16>
    %cst = arith.constant dense<0.000000e+00> : vector<8x256xf32>
    %2 = tpu.matmul %0, %1, %cst {dimension_numbers = #tpu.dot_dimension_numbers<[1], [0], [0], [1], [0, 0, 1, 1], [], []>} : vector<8x32xbf16>, vector<32x256xbf16>, vector<8x256xf32> -> vector<8x256xf32>
    %c0_3 = arith.constant 0 : index
    %c0_4 = arith.constant 0 : index
    %3 = vector.load %arg2[%c0_3, %c0_4] : memref<1x256xf32, #tpu.memory_space<vmem>>, vector<1x256xf32>
    %4 = vector.broadcast %3 : vector<1x256xf32> to vector<8x256xf32>
    %5 = arith.addf %2, %4 : vector<8x256xf32>
    %c0_5 = arith.constant 0 : index
    %c0_6 = arith.constant 0 : index
    %6 = vector.load %arg3[%c0_5, %c0_6] : memref<8x256xf32, #tpu.memory_space<vmem>>, vector<8x256xf32>
    tpu.vector_store %arg3[%c0_5, %c0_6], %5 {strides = array<i32>} : memref<8x256xf32, #tpu.memory_space<vmem>>, vector<8x256xf32>,
    return
  }
}

</mosaic_0001>

<llo_original>
// kernel: levit_heads_forward.1
$region0: #{levit_heads_forward.1}
  #allocation0 [shape = 'u32[]', space=smem, size = 0x4, offset = 0x4, fixed_abs, tag = 'smem constant byte address 0x4 - core index']
  #allocation1 [shape = 'u32[144,128]{1,0:T(1,128)}', space=vmem, size = 0x12000, scoped, tag = 'internal scratch']
  %s0 = inlined_call_operand.vmem [shape: bf16[8,32], index: 0, kind: input, shape index: {}]
  %s1 = inlined_call_operand.hbm [shape: bf16[32,256], index: 1, kind: input, shape index: {}]
  %s2 = inlined_call_operand.vmem [shape: f32[1,256], index: 2, kind: input, shape index: {}]
  %s3 = inlined_call_operand.hbm [shape: f32[8,256], index: 3, kind: output, shape index: {}]
  %s4 = sld [smem:[#allocation0]]
  $region26: #{levit_heads_forward.1} parent=0
    _
  %s6 = ssub.s32 1, %s4
  %s7 = scalar_select 0, %s6, %s4
  $region1: #{levit_heads_forward.1} parent=0
    #allocation2 [shape = 'u8[16384]{0}', space=vmem, size = 0x4000, scoped, tag = 'input window, operand 1, single buffered']
    #allocation3 [shape = 's32[1]{0}', space=sflag, size = 0x4, scoped, tag = 'scoped memory for levit_heads_forward.1']
    #allocation4 [shape = 's32[1]{0}', space=sflag, size = 0x4, scoped, tag = 'scoped memory for levit_heads_forward.1']
    #allocation5 [shape = 'u8[8192]{0}', space=vmem, size = 0x2000, scoped, tag = 'output window, operand 0, single buffered']
    %8 = vsyncpa [#allocation3], 0
    %9 = vsyncpa [#allocation4], 0
    // Predicated region
    $region2: #{levit_heads_forward.1} parent=1 // pred_check
      _
    $region3: #{levit_heads_forward.1} parent=1 // pred_check_branch
      %11 = sbr.rel (0) target = $region5
    $region4: #{levit_heads_forward.1} parent=1 // pred_region
      _
    $region5: #{levit_heads_forward.1} parent=1 // pred_fallthru
      _
    // Predicated region
    $region6: #{levit_heads_forward.1} parent=1 // pred_check
      _
    $region7: #{levit_heads_forward.1} parent=1 // pred_check_branch
      %13 = sbr.rel (0) target = $region9
    $region8: #{levit_heads_forward.1} parent=1 // pred_region
      %s15 = ssub.s32 512, 512
      %16 = vsyncadd [#allocation3], %s15
      %s17 = sshll.u32 [#allocation2], 4
      %s18 = int_to_ptr.vmem [resolvable:$true] %s17
      %23 = dma.hbm_to_vmem [thread:$0]  %s1, 512, %s18, [#allocation3], 128, 128, 8
    $region9: #{levit_heads_forward.1} parent=1 // pred_fallthru
      _
    // Predicated region
    $region10: #{levit_heads_forward.1} parent=1 // pred_check
      _
    $region11: #{levit_heads_forward.1} parent=1 // pred_check_branch
      %25 = sbr.rel (0) target = $region13
    $region12: #{levit_heads_forward.1} parent=1 // pred_region
      _
    $region13: #{levit_heads_forward.1} parent=1 // pred_fallthru
      _
    // Predicated region
    $region14: #{levit_heads_forward.1} parent=1 // pred_check
      _
    $region15: #{levit_heads_forward.1} parent=1 // pred_check_branch
      %27 = sbr.rel (0) target = $region17
    $region16: #{levit_heads_forward.1} parent=1 // pred_region
      %28 = dma.done [#allocation3], 512
    $region17: #{levit_heads_forward.1} parent=1 // pred_fallthru
      _
    %v30 = vld [vmem:[%s0] sm:$0xf]
    %v31 = vld [vmem:[#allocation2] sm:$0xff]
    %v32 = vld [vmem:[#allocation2 + $0x8] sm:$0xff]
    %v33 = vld [vmem:[#allocation2 + $0x10] sm:$0xff]
    %v34 = vld [vmem:[#allocation2 + $0x18] sm:$0xff]
    %v35 = vld [vmem:[%s2] sm:$0x3]
    %v37 = vlaneseq
    %v38 = vshrl.u32 %v37, 7
    %v39 = vsub.s32 0, %v38
    %v40 = vrot.slane %v35, %v39
    %v41 = vlaneseq
    %v42 = vshrl.u32 %v41, 7
    %v43 = vsub.s32 1, %v42
    %v44 = vrot.slane %v35, %v43
    %v51 = vunpack.c.l.b16 %v31
    %v52 = vunpack.c.h.b16 %v31
    %v53 = vunpack.c.l.b16 %v32
    %v54 = vunpack.c.h.b16 %v32
    %v55 = vunpack.c.l.b16 %v33
    %v56 = vunpack.c.h.b16 %v33
    %v57 = vunpack.c.l.b16 %v34
    %v58 = vunpack.c.h.b16 %v34
    %v59 = vpack.c.b16 %v53, %v51
    %v60 = vpack.c.b16 %v54, %v52
    %v61 = vpack.c.b16 %v57, %v55
    %v62 = vpack.c.b16 %v58, %v56
    %vm67 = vcmask 261120
    %v69 = vsel %vm67, %v30, 0
    %71 = vmatprep.subr.bf16.mxu0 %v60
    %72 = vmatpush1.bf16.msra.mxu0 %v59
    %73 = vmatprep.subr.bf16.mxu0 %v62
    %74 = vmatpush1.bf16.msra.mxu0 %v61
    %75 = vmatprep.subr.bf16.mxu0 0
    %76 = vmatpush1.bf16.msra.mxu0 0
    %77 = vmatprep.subr.bf16.mxu0 0
    %78 = vmatpush1.bf16.msra.mxu0 0
    %79 = vmatprep.subr.bf16.mxu0 0
    %80 = vmatpush1.bf16.msra.mxu0 0
    %81 = vmatprep.subr.bf16.mxu0 0
    %82 = vmatpush1.bf16.msra.mxu0 0
    %83 = vmatprep.subr.bf16.mxu0 0
    %84 = vmatpush1.bf16.msra.mxu0 0
    %85 = vmatprep.subr.bf16.mxu0 0
    %86 = vmatpush1.bf16.msra.mxu0 0
    %87 = vmatprep.subr.bf16.mxu0 0
    %88 = vmatpush1.bf16.msra.mxu0 0
    %89 = vmatprep.subr.bf16.mxu0 0
    %90 = vmatpush1.bf16.msra.mxu0 0
    %91 = vmatprep.subr.bf16.mxu0 0
    %92 = vmatpush1.bf16.msra.mxu0 0
    %93 = vmatprep.subr.bf16.mxu0 0
    %94 = vmatpush1.bf16.msra.mxu0 0
    %95 = vmatprep.subr.bf16.mxu0 0
    %96 = vmatpush1.bf16.msra.mxu0 0
    %97 = vmatprep.subr.bf16.mxu0 0
    %98 = vmatpush1.bf16.msra.mxu0 0
    %99 = vmatprep.subr.bf16.mxu0 0
    %100 = vmatpush1.bf16.msra.mxu0 0
    %101 = vmatprep.subr.bf16.mxu0 0
    %102 = vmatpush1.bf16.msra.mxu0 0
    %103 = vmatprep.mubr.bf16.mxu0 0
    %104 = vmatmul.mubr.bf16.gmra.mrb[0].mxu0 %v69
    %v105 = vpop.f32.mrb[0].mxu0
    %v106 = vadd.f32 %v40, %v105
    %v107 = vpop.f32.mrb[0].mxu0
    %v108 = vadd.f32 %v44, %v107
    %v109 = vpop.f32.mrb[0].mxu0
    %v110 = vpop.f32.mrb[0].mxu0
    %111 = vdwg.mxu0
    %112 = vst [vmem:[#allocation5] sm:$0xff] %v106
    %113 = vst [vmem:[#allocation5 + $0x8] sm:$0xff] %v108
    // Predicated region
    $region18: #{levit_heads_forward.1} parent=1 // pred_check
      _
    $region19: #{levit_heads_forward.1} parent=1 // pred_check_branch
      %115 = sbr.rel (0) target = $region21
    $region20: #{levit_heads_forward.1} parent=1 // pred_region
      %s117 = ssub.s32 256, 256
      %118 = vsyncadd [#allocation4], %s117
      %s120 = sshll.u32 [#allocation5], 4
      %s121 = int_to_ptr.vmem [resolvable:$true] %s120
      %123 = dma.vmem_to_hbm [thread:$0]  %s121, 256, %s3, [#allocation4]
    $region21: #{levit_heads_forward.1} parent=1 // pred_fallthru
      _
    // Predicated region
    $region22: #{levit_heads_forward.1} parent=1 // pred_check
      _
    $region23: #{levit_heads_forward.1} parent=1 // pred_check_branch
      %125 = sbr.rel (0) target = $region25
    $region24: #{levit_heads_forward.1} parent=1 // pred_region
      %126 = dma.done [#allocation4], 256
    $region25: #{levit_heads_forward.1} parent=1 // pred_fallthru
      _
    %127 = vsyncpa [#allocation3], 1
    %128 = vsyncpa [#allocation4], 1

</llo_original>
